<compile_context>
chip_gen: v7x
topology: tpu7x:2x2x1
jax: 0.10.0
libtpu: 0.0.40
codegen_flags: <defaults>
</compile_context>

<pallas_src>
import jax
import jax.numpy as jnp
import numpy as np
from jax.experimental import pallas as pl
from jax.experimental.pallas import tpu as pltpu


def _sobel_kernel(x_ref, rowm_ref, colm_ref, o_ref):
    x = x_ref[...]                      # (R, Wp) float32, R = Bt*Hp rows (whole images)
    R, Wp = x.shape

    # Neighbor row shifts (circular; wraparound only contaminates border rows, masked to 0).
    xd = pltpu.roll(x, 1, 0)            # xd[i, :] = x[i-1, :]
    xu = pltpu.roll(x, R - 1, 0)        # xu[i, :] = x[i+1, :]   (non-negative shift)

    # Separable Sobel taps -> only 4 lane rolls on top of the 2 sublane rolls above.
    v = 2.0 * (xd + xu) + 4.0 * x       # vertical [2,4,2] pass (for Gx)
    d = xd - xu                         # vertical [1,0,-1] pass (for Gy)

    def shr(a):                         # shr(a)[:, j] = a[:, j-1]
        return pltpu.roll(a, 1, 1)

    def shl(a):                         # shl(a)[:, j] = a[:, j+1]
        return pltpu.roll(a, Wp - 1, 1)

    gx = shr(v) - shl(v)                                 # horizontal [1,0,-1]
    gy = 2.0 * (shr(d) + shl(d)) + 4.0 * d               # horizontal [2,4,2]

    mag = jnp.sqrt(gx * gx + gy * gy)

    # Zero per-image border rows/cols (and padding) via precomputed broadcast masks.
    o_ref[...] = (mag * rowm_ref[...] * colm_ref[...]).astype(o_ref.dtype)


def sobel(img, *, target_block_bytes=2 << 20):
    """img: (B, 1, H, W) float32 -> (B, 1, H, W) float32 (Sobel edge magnitude, zeroed border)."""
    B, C, H, W = img.shape
    assert C == 1, "Sobel module expects a single input channel"
    assert H >= 3 and W >= 3, "Sobel needs H, W >= 3"
    dtype = img.dtype
    itemsize = int(jnp.dtype(dtype).itemsize)

    # Lane/sublane-dense padding.
    Wp = pl.cdiv(W, 128) * 128
    Hp = pl.cdiv(H, 8) * 8

    # Images per grid step: biggest batch tile that keeps the block around target_block_bytes.
    bytes_per_img = Hp * Wp * itemsize
    Bt = max(1, min(B, target_block_bytes // bytes_per_img))
    Bp = pl.cdiv(B, Bt) * Bt            # pad batch so every block holds whole images
    num_blocks = Bp // Bt
    Rb = Bt * Hp                        # rows per block (multiple of 8)
    block_bytes = Rb * Wp * itemsize

    # Zero-pad and flatten batch into the sublane axis: (Bp*Hp, Wp).
    x = img.reshape(B, H, W)
    x = jnp.pad(x, ((0, Bp - B), (0, Hp - H), (0, Wp - W)))
    x2 = x.reshape(Bp * Hp, Wp)

    # Precomputed interior masks (tiny; broadcast inside the kernel).
    row_keep_img = np.zeros((Hp, 1), np.float32)
    row_keep_img[1:H - 1, 0] = 1.0
    row_keep = jnp.asarray(np.tile(row_keep_img, (Bp, 1)))      # (Bp*Hp, 1)
    col_keep_np = np.zeros((1, Wp), np.float32)
    col_keep_np[0, 1:W - 1] = 1.0
    col_keep = jnp.asarray(col_keep_np)                         # (1, Wp)

    # VMEM budget: ~2x double-buffered in + out blocks plus temporaries; stay < 64 MiB (v7x).
    vmem_limit = int(min(60 * 2**20, max(16 * 2**20, 16 * block_bytes)))

    out = pl.pallas_call(
        _sobel_kernel,
        out_shape=jax.ShapeDtypeStruct((Bp * Hp, Wp), dtype),
        grid_spec=pltpu.PrefetchScalarGridSpec(
            num_scalar_prefetch=0,
            grid=(num_blocks,),
            in_specs=[
                pl.BlockSpec((Rb, Wp), lambda i: (i, 0)),
                pl.BlockSpec((Rb, 1), lambda i: (i, 0)),
                pl.BlockSpec((1, Wp), lambda i: (0, 0)),
            ],
            out_specs=pl.BlockSpec((Rb, Wp), lambda i: (i, 0)),
        ),
        compiler_params=pltpu.CompilerParams(
            dimension_semantics=("parallel",),
            vmem_limit_bytes=vmem_limit,
        ),
    )(x2, row_keep, col_keep)

    out = out.reshape(Bp, Hp, Wp)[:B, :H, :W]
    return out.reshape(B, 1, H, W)


def sobel_ref(img):
    """Pure-JAX reference reproducing the PyTorch module."""
    Gx = jnp.array([[2.0, 0.0, -2.0], [4.0, 0.0, -4.0], [2.0, 0.0, -2.0]], jnp.float32)
    Gy = jnp.array([[2.0, 4.0, 2.0], [0.0, 0.0, 0.0], [-2.0, -4.0, -2.0]], jnp.float32)
    G = jnp.stack([Gx, Gy])[:, None]  # (2, 1, 3, 3) OIHW
    y = jax.lax.conv_general_dilated(
        img, G, window_strides=(1, 1), padding=((1, 1), (1, 1)),
        dimension_numbers=("NCHW", "OIHW", "NCHW"))
    m = jnp.sqrt(jnp.sum(y * y, axis=1, keepdims=True))
    m = m.at[:, :, -1, :].set(0.0)
    m = m.at[:, :, :, -1].set(0.0)
    m = m.at[:, :, 0, :].set(0.0)
    m = m.at[:, :, :, 0].set(0.0)
    return m


if __name__ == "__main__":
    key = jax.random.PRNGKey(0)
    img = jax.random.normal(key, (2, 1, 16, 16), dtype=jnp.float32)

    out = sobel(img)
    jax.block_until_ready(out)

    ref = sobel_ref(img)
    assert out.shape == (2, 1, 16, 16)
    assert jnp.allclose(out, ref, atol=1e-4, rtol=1e-5), "mismatch vs reference"

    print("KERNEL_OK")
</pallas_src>

<mosaic_0001>
module attributes {stable_mosaic.version = 11 : i64} {
  func.func @_sobel_kernel(%arg0: i32, %arg1: memref<32x128xf32, #tpu.memory_space<vmem>>, %arg2: memref<32x1xf32, #tpu.memory_space<vmem>>, %arg3: memref<1x128xf32, #tpu.memory_space<vmem>>, %arg4: memref<32x128xf32, #tpu.memory_space<vmem>>) attributes {dimension_semantics = [#tpu.dimension_semantics<parallel>], iteration_bounds = array<i64: 1>, scalar_prefetch = 0 : i64, scratch_operands = 0 : i64, tpu.core_type = #tpu.core_type<tc>, window_params = [{transform_indices = @transform_0, window_bounds = array<i64: 32, 128>}, {transform_indices = @transform_1, window_bounds = array<i64: 32, 1>}, {pipeline_mode = #tpu.pipeline_mode<synchronous>, transform_indices = @transform_2, window_bounds = array<i64: 1, 128>}, {transform_indices = @transform_3, window_bounds = array<i64: 32, 128>}]} {
    %c0 = arith.constant 0 : index
    %c0_0 = arith.constant 0 : index
    %0 = vector.load %arg1[%c0, %c0_0] : memref<32x128xf32, #tpu.memory_space<vmem>>, vector<32x128xf32>
    %c1_i32 = arith.constant 1 : i32
    %1 = tpu.dynamic_rotate %0 by %c1_i32 dim 0 : vector<32x128xf32>, i32 -> vector<32x128xf32>
    %c31_i32 = arith.constant 31 : i32
    %2 = tpu.dynamic_rotate %0 by %c31_i32 dim 0 : vector<32x128xf32>, i32 -> vector<32x128xf32>
    %3 = arith.addf %1, %2 : vector<32x128xf32>
    %cst = arith.constant 2.000000e+00 : f32
    %4 = vector.broadcast %cst : f32 to vector<32x128xf32>
    %5 = arith.mulf %4, %3 : vector<32x128xf32>
    %cst_1 = arith.constant 4.000000e+00 : f32
    %6 = vector.broadcast %cst_1 : f32 to vector<32x128xf32>
    %7 = arith.mulf %6, %0 : vector<32x128xf32>
    %8 = arith.addf %5, %7 : vector<32x128xf32>
    %9 = arith.subf %1, %2 : vector<32x128xf32>
    %c1_i32_2 = arith.constant 1 : i32
    %10 = tpu.dynamic_rotate %8 by %c1_i32_2 dim 1 : vector<32x128xf32>, i32 -> vector<32x128xf32>
    %c127_i32 = arith.constant 127 : i32
    %11 = tpu.dynamic_rotate %8 by %c127_i32 dim 1 : vector<32x128xf32>, i32 -> vector<32x128xf32>
    %12 = arith.subf %10, %11 : vector<32x128xf32>
    %c1_i32_3 = arith.constant 1 : i32
    %13 = tpu.dynamic_rotate %9 by %c1_i32_3 dim 1 : vector<32x128xf32>, i32 -> vector<32x128xf32>
    %c127_i32_4 = arith.constant 127 : i32
    %14 = tpu.dynamic_rotate %9 by %c127_i32_4 dim 1 : vector<32x128xf32>, i32 -> vector<32x128xf32>
    %15 = arith.addf %13, %14 : vector<32x128xf32>
    %cst_5 = arith.constant 2.000000e+00 : f32
    %16 = vector.broadcast %cst_5 : f32 to vector<32x128xf32>
    %17 = arith.mulf %16, %15 : vector<32x128xf32>
    %cst_6 = arith.constant 4.000000e+00 : f32
    %18 = vector.broadcast %cst_6 : f32 to vector<32x128xf32>
    %19 = arith.mulf %18, %9 : vector<32x128xf32>
    %20 = arith.addf %17, %19 : vector<32x128xf32>
    %21 = arith.mulf %12, %12 : vector<32x128xf32>
    %22 = arith.mulf %20, %20 : vector<32x128xf32>
    %23 = arith.addf %21, %22 : vector<32x128xf32>
    %24 = math.sqrt %23 : vector<32x128xf32>
    %c0_7 = arith.constant 0 : index
    %c0_8 = arith.constant 0 : index
    %25 = vector.load %arg2[%c0_7, %c0_8] : memref<32x1xf32, #tpu.memory_space<vmem>>, vector<32x1xf32>
    %26 = vector.broadcast %25 : vector<32x1xf32> to vector<32x128xf32>
    %27 = arith.mulf %24, %26 : vector<32x128xf32>
    %c0_9 = arith.constant 0 : index
    %c0_10 = arith.constant 0 : index
    %28 = vector.load %arg3[%c0_9, %c0_10] : memref<1x128xf32, #tpu.memory_space<vmem>>, vector<1x128xf32>
    %29 = vector.broadcast %28 : vector<1x128xf32> to vector<32x128xf32>
    %30 = arith.mulf %27, %29 : vector<32x128xf32>
    %c0_11 = arith.constant 0 : index
    %c0_12 = arith.constant 0 : index
    %31 = vector.load %arg4[%c0_11, %c0_12] : memref<32x128xf32, #tpu.memory_space<vmem>>, vector<32x128xf32>
    tpu.vector_store %arg4[%c0_11, %c0_12], %30 {strides = array<i32>} : memref<32x128xf32, #tpu.memory_space<vmem>>, vector<32x128xf32>,
    return
  }
  func.func @transform_0(%arg0: i32) -> (i32, i32) {
    %c0_i32 = arith.constant 0 : i32
    %c0_i32_0 = arith.constant 0 : i32
    return %arg0, %c0_i32 : i32, i32
  }
  func.func @transform_1(%arg0: i32) -> (i32, i32) {
    %c0_i32 = arith.constant 0 : i32
    %c0_i32_0 = arith.constant 0 : i32
    return %arg0, %c0_i32 : i32, i32
  }
  func.func @transform_2(%arg0: i32) -> (i32, i32) {
    %c0_i32 = arith.constant 0 : i32
    %c0_i32_0 = arith.constant 0 : i32
    %c0_i32_1 = arith.constant 0 : i32
    return %c0_i32, %c0_i32_0 : i32, i32
  }
  func.func @transform_3(%arg0: i32) -> (i32, i32) {
    %c0_i32 = arith.constant 0 : i32
    %c0_i32_0 = arith.constant 0 : i32
    return %arg0, %c0_i32 : i32, i32
  }
}

</mosaic_0001>

<llo_original>
// kernel: tpu_custom_call.1
$region0: #{tpu_custom_call.1}
  #allocation0 [shape = 'u32[]', space=smem, size = 0x4, offset = 0x4, fixed_abs, tag = 'smem constant byte address 0x4 - core index']
  #allocation1 [shape = 'u32[144,128]{1,0:T(1,128)}', space=vmem, size = 0x12000, scoped, tag = 'internal scratch']
  %s0 = inlined_call_operand.vmem [shape: f32[32,128], index: 0, kind: input, shape index: {}]
  %s1 = inlined_call_operand.vmem [shape: f32[32,1], index: 1, kind: input, shape index: {}]
  %s2 = inlined_call_operand.vmem [shape: f32[1,128], index: 2, kind: input, shape index: {}]
  %s3 = inlined_call_operand.hbm [shape: f32[32,128], index: 3, kind: output, shape index: {}]
  %s4 = sld [smem:[#allocation0]]
  $region22: #{tpu_custom_call.1} parent=0
    _
  %s6 = ssub.s32 1, %s4
  %s7 = scalar_select 0, %s6, %s4
  $region1: #{tpu_custom_call.1} parent=0
    #allocation2 [shape = 'u8[16384]{0}', space=vmem, size = 0x4000, scoped, tag = 'output window, operand 0, single buffered']
    #allocation3 [shape = 's32[1]{0}', space=sflag, size = 0x4, scoped, tag = 'scoped memory for tpu_custom_call.1']
    %8 = vsyncpa [#allocation3], 0
    // Predicated region
    $region2: #{tpu_custom_call.1} parent=1 // pred_check
      _
    $region3: #{tpu_custom_call.1} parent=1 // pred_check_branch
      %10 = sbr.rel (0) target = $region5
    $region4: #{tpu_custom_call.1} parent=1 // pred_region
      _
    $region5: #{tpu_custom_call.1} parent=1 // pred_fallthru
      _
    // Predicated region
    $region6: #{tpu_custom_call.1} parent=1 // pred_check
      _
    $region7: #{tpu_custom_call.1} parent=1 // pred_check_branch
      %12 = sbr.rel (0) target = $region9
    $region8: #{tpu_custom_call.1} parent=1 // pred_region
      _
    $region9: #{tpu_custom_call.1} parent=1 // pred_fallthru
      _
    // Predicated region
    $region10: #{tpu_custom_call.1} parent=1 // pred_check
      _
    $region11: #{tpu_custom_call.1} parent=1 // pred_check_branch
      %14 = sbr.rel (0) target = $region13
    $region12: #{tpu_custom_call.1} parent=1 // pred_region
      _
    $region13: #{tpu_custom_call.1} parent=1 // pred_fallthru
      _
    %v15 = vld [vmem:[%s0] sm:$0xff]
    %v16 = vld [vmem:[%s0 + $0x8] sm:$0xff]
    %v17 = vld [vmem:[%s0 + $0x10] sm:$0xff]
    %v18 = vld [vmem:[%s0 + $0x18] sm:$0xff]
    %v19 = vrot.slane %v15, 7
    %v20 = vrot.slane %v16, 7
    %v21 = vrot.slane %v17, 7
    %v22 = vrot.slane %v18, 7
    %v23 = vlaneseq
    %v24 = vshrl.u32 %v23, 7
    %vm25 = vcmp.lt.s32.totalorder %v24, 1
    %v26 = vsel %vm25, %v21, %v22
    %v27 = vsel %vm25, %v20, %v21
    %v28 = vsel %vm25, %v19, %v20
    %v29 = vsel %vm25, %v22, %v19
    %v30 = vrot.slane %v15, 1
    %v31 = vrot.slane %v16, 1
    %v32 = vrot.slane %v17, 1
    %v33 = vrot.slane %v18, 1
    %vm34 = vcmp.lt.s32.totalorder %v24, 7
    %v35 = vsel %vm34, %v32, %v33
    %v36 = vsel %vm34, %v31, %v32
    %v37 = vsel %vm34, %v30, %v31
    %v38 = vsel %vm34, %v33, %v30
    %v39 = vadd.f32 %v29, %v37
    %v40 = vadd.f32 %v28, %v36
    %v41 = vadd.f32 %v27, %v35
    %v42 = vadd.f32 %v26, %v38
    %v43 = vmul.f32 %v39, 2.0
    %v44 = vmul.f32 %v40, 2.0
    %v45 = vmul.f32 %v41, 2.0
    %v46 = vmul.f32 %v42, 2.0
    %v47 = vmul.f32 %v15, 4.0
    %v48 = vmul.f32 %v16, 4.0
    %v49 = vmul.f32 %v17, 4.0
    %v50 = vmul.f32 %v18, 4.0
    %v51 = vadd.f32 %v43, %v47
    %v52 = vadd.f32 %v44, %v48
    %v53 = vadd.f32 %v45, %v49
    %v54 = vadd.f32 %v46, %v50
    %v55 = vsub.f32 %v29, %v37
    %v56 = vsub.f32 %v28, %v36
    %v57 = vsub.f32 %v27, %v35
    %v58 = vsub.f32 %v26, %v38
    %59 = vrot.lane.b32.xlu0 %v51, 1
    %v60 = vpop.permute.xlu0 %59
    %61 = vrot.lane.b32.xlu0 %v52, 1
    %v62 = vpop.permute.xlu0 %61
    %63 = vrot.lane.b32.xlu0 %v53, 1
    %v64 = vpop.permute.xlu0 %63
    %65 = vrot.lane.b32.xlu0 %v54, 1
    %v66 = vpop.permute.xlu0 %65
    %67 = vrot.lane.b32.xlu0 %v51, 127
    %v68 = vpop.permute.xlu0 %67
    %69 = vrot.lane.b32.xlu0 %v52, 127
    %v70 = vpop.permute.xlu0 %69
    %71 = vrot.lane.b32.xlu0 %v53, 127
    %v72 = vpop.permute.xlu0 %71
    %73 = vrot.lane.b32.xlu0 %v54, 127
    %v74 = vpop.permute.xlu0 %73
    %v75 = vsub.f32 %v60, %v68
    %v76 = vsub.f32 %v62, %v70
    %v77 = vsub.f32 %v64, %v72
    %v78 = vsub.f32 %v66, %v74
    %79 = vrot.lane.b32.xlu0 %v55, 1
    %v80 = vpop.permute.xlu0 %79
    %81 = vrot.lane.b32.xlu0 %v56, 1
    %v82 = vpop.permute.xlu0 %81
    %83 = vrot.lane.b32.xlu0 %v57, 1
    %v84 = vpop.permute.xlu0 %83
    %85 = vrot.lane.b32.xlu0 %v58, 1
    %v86 = vpop.permute.xlu0 %85
    %87 = vrot.lane.b32.xlu0 %v55, 127
    %v88 = vpop.permute.xlu0 %87
    %89 = vrot.lane.b32.xlu0 %v56, 127
    %v90 = vpop.permute.xlu0 %89
    %91 = vrot.lane.b32.xlu0 %v57, 127
    %v92 = vpop.permute.xlu0 %91
    %93 = vrot.lane.b32.xlu0 %v58, 127
    %v94 = vpop.permute.xlu0 %93
    %v95 = vadd.f32 %v80, %v88
    %v96 = vadd.f32 %v82, %v90
    %v97 = vadd.f32 %v84, %v92
    %v98 = vadd.f32 %v86, %v94
    %v99 = vmul.f32 %v95, 2.0
    %v100 = vmul.f32 %v96, 2.0
    %v101 = vmul.f32 %v97, 2.0
    %v102 = vmul.f32 %v98, 2.0
    %v103 = vmul.f32 %v55, 4.0
    %v104 = vmul.f32 %v56, 4.0
    %v105 = vmul.f32 %v57, 4.0
    %v106 = vmul.f32 %v58, 4.0
    %v107 = vadd.f32 %v99, %v103
    %v108 = vadd.f32 %v100, %v104
    %v109 = vadd.f32 %v101, %v105
    %v110 = vadd.f32 %v102, %v106
    %v111 = vmul.f32 %v75, %v75
    %v112 = vmul.f32 %v76, %v76
    %v113 = vmul.f32 %v77, %v77
    %v114 = vmul.f32 %v78, %v78
    %v115 = vmul.f32 %v107, %v107
    %v116 = vmul.f32 %v108, %v108
    %v117 = vmul.f32 %v109, %v109
    %v118 = vmul.f32 %v110, %v110
    %v119 = vadd.f32 %v111, %v115
    %v120 = vadd.f32 %v112, %v116
    %v121 = vadd.f32 %v113, %v117
    %v122 = vadd.f32 %v114, %v118
    %v123 = vrsqrt.pop %v119
    %v124 = vmul.f32 %v119, %v123
    %vm125 = vcmp.eq.f32.partialorder %v119, inf
    %v126 = vsel %vm125, %v119, %v124
    %vm127 = vcmp.eq.f32.partialorder %v119, 0.0
    %v128 = vand.u32 %v119, 2147483648
    %v129 = vsel %vm127, %v128, %v126
    %v130 = vrsqrt.pop %v120
    %v131 = vmul.f32 %v120, %v130
    %vm132 = vcmp.eq.f32.partialorder %v120, inf
    %v133 = vsel %vm132, %v120, %v131
    %vm134 = vcmp.eq.f32.partialorder %v120, 0.0
    %v135 = vand.u32 %v120, 2147483648
    %v136 = vsel %vm134, %v135, %v133
    %v137 = vrsqrt.pop %v121
    %v138 = vmul.f32 %v121, %v137
    %vm139 = vcmp.eq.f32.partialorder %v121, inf
    %v140 = vsel %vm139, %v121, %v138
    %vm141 = vcmp.eq.f32.partialorder %v121, 0.0
    %v142 = vand.u32 %v121, 2147483648
    %v143 = vsel %vm141, %v142, %v140
    %v144 = vrsqrt.pop %v122
    %v145 = vmul.f32 %v122, %v144
    %vm146 = vcmp.eq.f32.partialorder %v122, inf
    %v147 = vsel %vm146, %v122, %v145
    %vm148 = vcmp.eq.f32.partialorder %v122, 0.0
    %v149 = vand.u32 %v122, 2147483648
    %v150 = vsel %vm148, %v149, %v147
    %v151 = vld [vmem:[%s1] sm:$0xff]
    %v152 = vld [vmem:[%s1 + $0x8] sm:$0xff]
    %v153 = vld [vmem:[%s1 + $0x10] sm:$0xff]
    %v154 = vld [vmem:[%s1 + $0x18] sm:$0xff]
    %156 = vset.pattern.permute.xlu0 0
    %157 = vperm.xlu0 %156, %v151
    %v158 = vpop.permute.xlu0 %157
    %161 = vset.pattern.permute.xlu0 0
    %162 = vperm.xlu0 %161, %v152
    %v163 = vpop.permute.xlu0 %162
    %166 = vset.pattern.permute.xlu0 0
    %167 = vperm.xlu0 %166, %v153
    %v168 = vpop.permute.xlu0 %167
    %171 = vset.pattern.permute.xlu0 0
    %172 = vperm.xlu0 %171, %v154
    %v173 = vpop.permute.xlu0 %172
    %v175 = vmul.f32 %v129, %v158
    %v176 = vmul.f32 %v136, %v163
    %v177 = vmul.f32 %v143, %v168
    %v178 = vmul.f32 %v150, %v173
    %v179 = vld [vmem:[%s2] sm:$0x1]
    %v181 = vlaneseq
    %v182 = vshrl.u32 %v181, 7
    %v183 = vsub.s32 0, %v182
    %v184 = vrot.slane %v179, %v183
    %v186 = vmul.f32 %v175, %v184
    %v187 = vmul.f32 %v176, %v184
    %v188 = vmul.f32 %v177, %v184
    %v189 = vmul.f32 %v178, %v184
    %190 = vst [vmem:[#allocation2] sm:$0xff] %v186
    %191 = vst [vmem:[#allocation2 + $0x8] sm:$0xff] %v187
    %192 = vst [vmem:[#allocation2 + $0x10] sm:$0xff] %v188
    %193 = vst [vmem:[#allocation2 + $0x18] sm:$0xff] %v189
    // Predicated region
    $region14: #{tpu_custom_call.1} parent=1 // pred_check
      _
    $region15: #{tpu_custom_call.1} parent=1 // pred_check_branch
      %195 = sbr.rel (0) target = $region17
    $region16: #{tpu_custom_call.1} parent=1 // pred_region
      %s197 = ssub.s32 512, 512
      %198 = vsyncadd [#allocation3], %s197
      %s199 = sshll.u32 [#allocation2], 4
      %s200 = int_to_ptr.vmem [resolvable:$true] %s199
      %205 = dma.vmem_to_hbm [thread:$0]  %s200, 512, %s3, [#allocation3], 128, 128, 8
    $region17: #{tpu_custom_call.1} parent=1 // pred_fallthru
      _
    // Predicated region
    $region18: #{tpu_custom_call.1} parent=1 // pred_check
      _
    $region19: #{tpu_custom_call.1} parent=1 // pred_check_branch
      %207 = sbr.rel (0) target = $region21
    $region20: #{tpu_custom_call.1} parent=1 // pred_region
      %208 = dma.done [#allocation3], 512
    $region21: #{tpu_custom_call.1} parent=1 // pred_fallthru
      _
    %209 = vsyncpa [#allocation3], 1

</llo_original>
